<compile_context>
chip_gen: v6e
topology: v6e:2x2x1
jax: 0.10.0
libtpu: 0.0.40
codegen_flags: <defaults>
</compile_context>

<pallas_src>
import jax
import jax.numpy as jnp
from jax.experimental import pallas as pl
from jax.experimental.pallas import tpu as pltpu

INPUT_SIZE = 300
HIDDEN_SIZE = 128


# ----------------------------------------------------------------------------
# Parameter preparation (run ONCE, outside the hot path).
# ----------------------------------------------------------------------------
def prepare_params(weight, bias, *, compute_dtype=jnp.bfloat16):
    """weight: (4H, In+H) in module gate order [f|i|c|o]; bias: (4H,).

    Returns (wx, wh, b):
      wx: (In_pad, 4H) compute_dtype, gate order [f|i|o|c], zero-padded rows
      wh: (H, 4H)      compute_dtype, gate order [f|i|o|c]
      b : (1, 4H)      float32,        gate order [f|i|o|c]
    """
    four_h, tot = weight.shape
    H = four_h // 4
    In = tot - H
    In_pad = int(pl.cdiv(In, 128)) * 128          # 300 -> 384

    # Reorder gate rows [f|i|c|o] -> [f|i|o|c] (sigmoids contiguous, tanh last).
    def reorder(a):
        return jnp.concatenate(
            [a[:H], a[H:2 * H], a[3 * H:4 * H], a[2 * H:3 * H]], axis=0)

    w_r = reorder(weight)                          # (4H, In+H)
    b_r = reorder(bias)                            # (4H,)

    wx = jnp.transpose(w_r[:, :In])                # (In, 4H)
    wh = jnp.transpose(w_r[:, In:])                # (H, 4H)
    wx = jnp.pad(wx, ((0, In_pad - In), (0, 0)))   # (In_pad, 4H), zero rows

    return (wx.astype(compute_dtype),
            wh.astype(compute_dtype),
            b_r.reshape(1, 4 * H).astype(jnp.float32))


# ----------------------------------------------------------------------------
# Shared cell math (gate order [f|i|o|c], f32 accumulation).
# ----------------------------------------------------------------------------
def _cell_math(x, h, c, wx_ref, wh_ref, b_ref):
    H = c.shape[-1]
    gates = jnp.dot(x.astype(wx_ref.dtype), wx_ref[...],
                    preferred_element_type=jnp.float32)
    gates = gates + jnp.dot(h.astype(wh_ref.dtype), wh_ref[...],
                            preferred_element_type=jnp.float32)
    gates = gates + b_ref[...]                     # (1, 4H) broadcasts over batch

    sig = jax.nn.sigmoid(gates[:, :3 * H])         # [f | i | o] in one shot
    g = jnp.tanh(gates[:, 3 * H:])                 # cell candidate
    f_g = sig[:, 0 * H:1 * H]
    i_g = sig[:, 1 * H:2 * H]
    o_g = sig[:, 2 * H:3 * H]

    c_t = f_g * c + i_g * g
    h_t = o_g * jnp.tanh(c_t)
    return h_t, c_t


# ----------------------------------------------------------------------------
# Single-step kernel (matches the module's forward exactly).
# ----------------------------------------------------------------------------
def _lstm_cell_kernel(x_ref, h_ref, c_ref, wx_ref, wh_ref, b_ref,
                      h_out_ref, c_out_ref):
    h_t, c_t = _cell_math(x_ref[...], h_ref[...], c_ref[...],
                          wx_ref, wh_ref, b_ref)
    h_out_ref[...] = h_t
    c_out_ref[...] = c_t


def lstm_cell(x_t, h_prev, c_prev, wx, wh, b):
    """x_t: (B, In) f32, h_prev/c_prev: (B, H) f32, wx/wh/b from prepare_params."""
    B, In = x_t.shape
    H = h_prev.shape[1]
    In_pad = wx.shape[0]
    if In_pad != In:
        x_t = jnp.pad(x_t, ((0, 0), (0, In_pad - In)))

    full = lambda shape: pl.BlockSpec(shape, lambda: (0,) * len(shape))
    h_t, c_t = pl.pallas_call(
        _lstm_cell_kernel,
        out_shape=(
            jax.ShapeDtypeStruct((B, H), jnp.float32),
            jax.ShapeDtypeStruct((B, H), jnp.float32),
        ),
        in_specs=[
            full((B, In_pad)),
            full((B, H)),
            full((B, H)),
            full((In_pad, 4 * H)),
            full((H, 4 * H)),
            full((1, 4 * H)),
        ],
        out_specs=(full((B, H)), full((B, H))),
        # In-place state update when the caller donates h/c (recurrence case).
        input_output_aliases={1: 0, 2: 1},
    )(x_t, h_prev, c_prev, wx, wh, b)
    return h_t, c_t


# ----------------------------------------------------------------------------
# Sequence kernel: time loop inside one pallas_call, weights VMEM-resident.
# ----------------------------------------------------------------------------
def _lstm_seq_kernel(x_ref, h0_ref, c0_ref, wx_ref, wh_ref, b_ref,
                     h_seq_ref, c_out_ref, h_sc, c_sc):
    t = pl.program_id(0)

    @pl.when(t == 0)
    def _():
        h_sc[...] = h0_ref[...]
        c_sc[...] = c0_ref[...]

    h_t, c_t = _cell_math(x_ref[...], h_sc[...], c_sc[...],
                          wx_ref, wh_ref, b_ref)

    h_sc[...] = h_t
    c_sc[...] = c_t
    h_seq_ref[...] = h_t          # per-step hidden state output
    c_out_ref[...] = c_t          # resident block; last write survives


def lstm_sequence(x_seq, h0, c0, wx, wh, b):
    """Apply the cell over x_seq: (T, B, In). Returns (h_seq (T,B,H), c_T (B,H))."""
    T, B, In = x_seq.shape
    H = h0.shape[1]
    In_pad = wx.shape[0]
    if In_pad != In:
        x_seq = jnp.pad(x_seq, ((0, 0), (0, 0), (0, In_pad - In)))

    h_seq, c_T = pl.pallas_call(
        _lstm_seq_kernel,
        out_shape=(
            jax.ShapeDtypeStruct((T, B, H), jnp.float32),
            jax.ShapeDtypeStruct((B, H), jnp.float32),
        ),
        grid_spec=pltpu.PrefetchScalarGridSpec(
            num_scalar_prefetch=0,
            grid=(T,),
            in_specs=[
                # x: one timestep per grid point (leading dim squeezed out).
                pl.BlockSpec((None, B, In_pad), lambda t: (t, 0, 0)),
                # h0/c0 and weights: constant block index -> stay resident in
                # VMEM for the whole grid (no per-step weight re-DMA).
                pl.BlockSpec((B, H), lambda t: (0, 0)),
                pl.BlockSpec((B, H), lambda t: (0, 0)),
                pl.BlockSpec((In_pad, 4 * H), lambda t: (0, 0)),
                pl.BlockSpec((H, 4 * H), lambda t: (0, 0)),
                pl.BlockSpec((1, 4 * H), lambda t: (0, 0)),
            ],
            out_specs=(
                pl.BlockSpec((None, B, H), lambda t: (t, 0, 0)),
                pl.BlockSpec((B, H), lambda t: (0, 0)),
            ),
            scratch_shapes=[
                pltpu.VMEM((B, H), jnp.float32),   # h carry
                pltpu.VMEM((B, H), jnp.float32),   # c carry
            ],
        ),
        compiler_params=pltpu.CompilerParams(
            dimension_semantics=("arbitrary",)),   # time axis is sequential
    )(x_seq, h0, c0, wx, wh, b)
    return h_seq, c_T


# ----------------------------------------------------------------------------
# Pure-JAX f32 reference (module semantics, gate order [f|i|c|o]).
# ----------------------------------------------------------------------------
def lstm_cell_ref(x_t, h_prev, c_prev, weight, bias):
    combined = jnp.concatenate((x_t, h_prev), axis=1)
    gates = combined @ weight.T + bias
    f_g, i_g, c_g, o_g = jnp.split(gates, 4, axis=1)
    f_g = jax.nn.sigmoid(f_g)
    i_g = jax.nn.sigmoid(i_g)
    c_g = jnp.tanh(c_g)
    o_g = jax.nn.sigmoid(o_g)
    c_t = f_g * c_prev + i_g * c_g
    h_t = o_g * jnp.tanh(c_t)
    return h_t, c_t


if __name__ == "__main__":
    B, T = 8, 8
    key = jax.random.PRNGKey(0)
    kx, kh, kc, kw, kb, ks = jax.random.split(key, 6)

    x_t = jax.random.normal(kx, (B, INPUT_SIZE), dtype=jnp.float32)
    h_prev = jax.random.normal(kh, (B, HIDDEN_SIZE), dtype=jnp.float32)
    c_prev = jax.random.normal(kc, (B, HIDDEN_SIZE), dtype=jnp.float32)
    x_seq = jax.random.normal(ks, (T, B, INPUT_SIZE), dtype=jnp.float32)

    # Deterministic nn.Linear-style init: U(-1/sqrt(fan_in), 1/sqrt(fan_in)).
    fan_in = INPUT_SIZE + HIDDEN_SIZE
    bound = 1.0 / jnp.sqrt(jnp.float32(fan_in))
    weight = jax.random.uniform(kw, (4 * HIDDEN_SIZE, fan_in),
                                minval=-bound, maxval=bound, dtype=jnp.float32)
    bias = jax.random.uniform(kb, (4 * HIDDEN_SIZE,),
                              minval=-bound, maxval=bound, dtype=jnp.float32)

    # One-time parameter prep (hoisted out of the hot path).
    wx, wh, b = prepare_params(weight, bias)

    # ---- single step (module forward) ----
    h_t, c_t = lstm_cell(x_t, h_prev, c_prev, wx, wh, b)
    jax.block_until_ready((h_t, c_t))
    h_ref, c_ref = lstm_cell_ref(x_t, h_prev, c_prev, weight, bias)
    # bf16 weights -> relaxed tolerance vs f32 reference.
    assert jnp.allclose(h_t, h_ref, atol=2e-2, rtol=2e-2)
    assert jnp.allclose(c_t, c_ref, atol=2e-2, rtol=2e-2)

    # ---- sequence (weights resident across grid=(T,)) ----
    h_seq, c_T = lstm_sequence(x_seq, h_prev, c_prev, wx, wh, b)
    jax.block_until_ready((h_seq, c_T))

    h, c = h_prev, c_prev
    hs = []
    for t in range(T):
        h, c = lstm_cell_ref(x_seq[t], h, c, weight, bias)
        hs.append(h)
    h_seq_ref = jnp.stack(hs)
    assert jnp.allclose(h_seq, h_seq_ref, atol=3e-2, rtol=3e-2)
    assert jnp.allclose(c_T, c, atol=3e-2, rtol=3e-2)

    print("KERNEL_OK")
</pallas_src>

<mosaic_0001>
module attributes {stable_mosaic.version = 11 : i64} {
  func.func @_lstm_cell_kernel(%arg0: memref<8x384xf32, #tpu.memory_space<vmem>>, %arg1: memref<8x128xf32, #tpu.memory_space<vmem>>, %arg2: memref<8x128xf32, #tpu.memory_space<vmem>>, %arg3: memref<384x512xbf16, #tpu.memory_space<vmem>>, %arg4: memref<128x512xbf16, #tpu.memory_space<vmem>>, %arg5: memref<1x512xf32, #tpu.memory_space<vmem>>, %arg6: memref<8x128xf32, #tpu.memory_space<vmem>>, %arg7: memref<8x128xf32, #tpu.memory_space<vmem>>) attributes {dimension_semantics = [], scalar_prefetch = 0 : i64, scratch_operands = 0 : i64, tpu.core_type = #tpu.core_type<tc>} {
    %c0 = arith.constant 0 : index
    %c0_0 = arith.constant 0 : index
    %0 = vector.load %arg0[%c0, %c0_0] : memref<8x384xf32, #tpu.memory_space<vmem>>, vector<8x384xf32>
    %c0_1 = arith.constant 0 : index
    %c0_2 = arith.constant 0 : index
    %1 = vector.load %arg1[%c0_1, %c0_2] : memref<8x128xf32, #tpu.memory_space<vmem>>, vector<8x128xf32>
    %c0_3 = arith.constant 0 : index
    %c0_4 = arith.constant 0 : index
    %2 = vector.load %arg2[%c0_3, %c0_4] : memref<8x128xf32, #tpu.memory_space<vmem>>, vector<8x128xf32>
    %3 = arith.truncf %0 : vector<8x384xf32> to vector<8x384xbf16>
    %c0_5 = arith.constant 0 : index
    %c0_6 = arith.constant 0 : index
    %4 = vector.load %arg3[%c0_5, %c0_6] : memref<384x512xbf16, #tpu.memory_space<vmem>>, vector<384x512xbf16>
    %cst = arith.constant dense<0.000000e+00> : vector<8x512xf32>
    %5 = tpu.matmul %3, %4, %cst {dimension_numbers = #tpu.dot_dimension_numbers<[1], [0], [0], [1], [0, 0, 1, 1], [], []>} : vector<8x384xbf16>, vector<384x512xbf16>, vector<8x512xf32> -> vector<8x512xf32>
    %6 = arith.truncf %1 : vector<8x128xf32> to vector<8x128xbf16>
    %c0_7 = arith.constant 0 : index
    %c0_8 = arith.constant 0 : index
    %7 = vector.load %arg4[%c0_7, %c0_8] : memref<128x512xbf16, #tpu.memory_space<vmem>>, vector<128x512xbf16>
    %cst_9 = arith.constant dense<0.000000e+00> : vector<8x512xf32>
    %8 = tpu.matmul %6, %7, %cst_9 {dimension_numbers = #tpu.dot_dimension_numbers<[1], [0], [0], [1], [0, 0, 1, 1], [], []>} : vector<8x128xbf16>, vector<128x512xbf16>, vector<8x512xf32> -> vector<8x512xf32>
    %9 = arith.addf %5, %8 : vector<8x512xf32>
    %c0_10 = arith.constant 0 : index
    %c0_11 = arith.constant 0 : index
    %10 = vector.load %arg5[%c0_10, %c0_11] : memref<1x512xf32, #tpu.memory_space<vmem>>, vector<1x512xf32>
    %11 = vector.broadcast %10 : vector<1x512xf32> to vector<8x512xf32>
    %12 = arith.addf %9, %11 : vector<8x512xf32>
    %13 = vector.extract_strided_slice %12 {offsets = [0, 0], sizes = [8, 384], strides = [1, 1]} : vector<8x512xf32> to vector<8x384xf32>
    %14 = arith.negf %13 : vector<8x384xf32>
    %15 = math.exp %14 : vector<8x384xf32>
    %cst_12 = arith.constant 1.000000e+00 : f32
    %16 = vector.broadcast %cst_12 : f32 to vector<8x384xf32>
    %17 = arith.addf %16, %15 : vector<8x384xf32>
    %18 = arith.divf %16, %17 : vector<8x384xf32>
    %19 = vector.extract_strided_slice %12 {offsets = [0, 384], sizes = [8, 128], strides = [1, 1]} : vector<8x512xf32> to vector<8x128xf32>
    %20 = math.tanh %19 : vector<8x128xf32>
    %21 = vector.extract_strided_slice %18 {offsets = [0, 0], sizes = [8, 128], strides = [1, 1]} : vector<8x384xf32> to vector<8x128xf32>
    %22 = vector.extract_strided_slice %18 {offsets = [0, 128], sizes = [8, 128], strides = [1, 1]} : vector<8x384xf32> to vector<8x128xf32>
    %23 = vector.extract_strided_slice %18 {offsets = [0, 256], sizes = [8, 128], strides = [1, 1]} : vector<8x384xf32> to vector<8x128xf32>
    %24 = arith.mulf %21, %2 : vector<8x128xf32>
    %25 = arith.mulf %22, %20 : vector<8x128xf32>
    %26 = arith.addf %24, %25 : vector<8x128xf32>
    %27 = math.tanh %26 : vector<8x128xf32>
    %28 = arith.mulf %23, %27 : vector<8x128xf32>
    %c0_13 = arith.constant 0 : index
    %c0_14 = arith.constant 0 : index
    %29 = vector.load %arg6[%c0_13, %c0_14] : memref<8x128xf32, #tpu.memory_space<vmem>>, vector<8x128xf32>
    tpu.vector_store %arg6[%c0_13, %c0_14], %28 {strides = array<i32>} : memref<8x128xf32, #tpu.memory_space<vmem>>, vector<8x128xf32>,
    %c0_15 = arith.constant 0 : index
    %c0_16 = arith.constant 0 : index
    %30 = vector.load %arg7[%c0_15, %c0_16] : memref<8x128xf32, #tpu.memory_space<vmem>>, vector<8x128xf32>
    tpu.vector_store %arg7[%c0_15, %c0_16], %26 {strides = array<i32>} : memref<8x128xf32, #tpu.memory_space<vmem>>, vector<8x128xf32>,
    return
  }
}

</mosaic_0001>

<llo_original>
// kernel: tpu_custom_call.1
$region0: #{tpu_custom_call.1}
  #allocation0 [shape = 'u32[]', space=smem, size = 0x4, offset = 0x4, fixed_abs, tag = 'smem constant byte address 0x4 - core index']
  #allocation1 [shape = 'u32[144,128]{1,0:T(1,128)}', space=vmem, size = 0x12000, scoped, tag = 'internal scratch']
  %s0 = inlined_call_operand.vmem [shape: f32[8,384], index: 0, kind: input, shape index: {}]
  %s1 = inlined_call_operand.hbm [shape: f32[8,128], index: 1, kind: input, shape index: {}, may-alias: {1,6}]
  %s2 = inlined_call_operand.hbm [shape: f32[8,128], index: 2, kind: input, shape index: {}, may-alias: {2,7}]
  %s3 = inlined_call_operand.hbm [shape: bf16[384,512], index: 3, kind: input, shape index: {}]
  %s4 = inlined_call_operand.hbm [shape: bf16[128,512], index: 4, kind: input, shape index: {}]
  %s5 = inlined_call_operand.vmem [shape: f32[1,512], index: 5, kind: input, shape index: {}]
  %s6 = inlined_call_operand.hbm [shape: f32[8,128], index: 6, kind: output, shape index: {0}, may-alias: {1,6}]
  %s7 = inlined_call_operand.hbm [shape: f32[8,128], index: 7, kind: output, shape index: {1}, may-alias: {2,7}]
  %8 = xla_tuple %s6, %s7
  %s9 = sld [smem:[#allocation0]]
  $region58: #{tpu_custom_call.1} parent=0
    _
  %s11 = ssub.s32 1, %s9
  %s12 = scalar_select 0, %s11, %s9
  $region1: #{tpu_custom_call.1} parent=0
    #allocation2 [shape = 'u8[4096]{0}', space=vmem, size = 0x1000, scoped, tag = 'input window, operand 1, single buffered']
    #allocation3 [shape = 's32[1]{0}', space=sflag, size = 0x4, scoped, tag = 'scoped memory for tpu_custom_call.1']
    #allocation4 [shape = 's32[1]{0}', space=sflag, size = 0x4, scoped, tag = 'scoped memory for tpu_custom_call.1']
    #allocation5 [shape = 'u8[4096]{0}', space=vmem, size = 0x1000, scoped, tag = 'input window, operand 2, single buffered']
    #allocation6 [shape = 's32[1]{0}', space=sflag, size = 0x4, scoped, tag = 'scoped memory for tpu_custom_call.1']
    #allocation7 [shape = 'u8[393216]{0}', space=vmem, size = 0x60000, scoped, tag = 'input window, operand 3, single buffered']
    #allocation8 [shape = 'u8[131072]{0}', space=vmem, size = 0x20000, scoped, tag = 'input window, operand 4, single buffered']
    #allocation9 [shape = 's32[1]{0}', space=sflag, size = 0x4, scoped, tag = 'scoped memory for tpu_custom_call.1']
    #allocation10 [shape = 'u8[4096]{0}', space=vmem, size = 0x1000, scoped, tag = 'output window, operand 0, single buffered']
    #allocation11 [shape = 'u8[4096]{0}', space=vmem, size = 0x1000, scoped, tag = 'output window, operand 1, single buffered']
    #allocation12 [shape = 's32[1]{0}', space=sflag, size = 0x4, scoped, tag = 'scoped memory for tpu_custom_call.1']
    %13 = vsyncpa [#allocation3], 0
    %14 = vsyncpa [#allocation6], 0
    %15 = vsyncpa [#allocation9], 0
    %16 = vsyncpa [#allocation4], 0
    %17 = vsyncpa [#allocation12], 0
    // Predicated region
    $region2: #{tpu_custom_call.1} parent=1 // pred_check
      _
    $region3: #{tpu_custom_call.1} parent=1 // pred_check_branch
      %19 = sbr.rel (0) target = $region5
    $region4: #{tpu_custom_call.1} parent=1 // pred_region
      _
    $region5: #{tpu_custom_call.1} parent=1 // pred_fallthru
      _
    // Predicated region
    $region6: #{tpu_custom_call.1} parent=1 // pred_check
      _
    $region7: #{tpu_custom_call.1} parent=1 // pred_check_branch
      %21 = sbr.rel (0) target = $region9
    $region8: #{tpu_custom_call.1} parent=1 // pred_region
      %s23 = ssub.s32 128, 128
      %24 = vsyncadd [#allocation3], %s23
      %s26 = sshll.u32 [#allocation2], 4
      %s27 = int_to_ptr.vmem [resolvable:$true] %s26
      %29 = dma.hbm_to_vmem [thread:$0]  %s1, 128, %s27, [#allocation3]
    $region9: #{tpu_custom_call.1} parent=1 // pred_fallthru
      _
    // Predicated region
    $region10: #{tpu_custom_call.1} parent=1 // pred_check
      _
    $region11: #{tpu_custom_call.1} parent=1 // pred_check_branch
      %31 = sbr.rel (0) target = $region13
    $region12: #{tpu_custom_call.1} parent=1 // pred_region
      %s33 = ssub.s32 128, 128
      %34 = vsyncadd [#allocation6], %s33
      %s36 = sshll.u32 [#allocation5], 4
      %s37 = int_to_ptr.vmem [resolvable:$true] %s36
      %39 = dma.hbm_to_vmem [thread:$0]  %s2, 128, %s37, [#allocation6]
    $region13: #{tpu_custom_call.1} parent=1 // pred_fallthru
      _
    // Predicated region
    $region14: #{tpu_custom_call.1} parent=1 // pred_check
      _
    $region15: #{tpu_custom_call.1} parent=1 // pred_check_branch
      %41 = sbr.rel (0) target = $region17
    $region16: #{tpu_custom_call.1} parent=1 // pred_region
      %s43 = ssub.s32 12288, 12288
      %44 = vsyncadd [#allocation6], %s43
      %s45 = sshll.u32 [#allocation7], 4
      %s46 = int_to_ptr.vmem [resolvable:$true] %s45
      %51 = dma.hbm_to_vmem [thread:$0]  %s3, 12288, %s46, [#allocation6], 256, 256, 16
    $region17: #{tpu_custom_call.1} parent=1 // pred_fallthru
      _
    // Predicated region
    $region18: #{tpu_custom_call.1} parent=1 // pred_check
      _
    $region19: #{tpu_custom_call.1} parent=1 // pred_check_branch
      %53 = sbr.rel (0) target = $region21
    $region20: #{tpu_custom_call.1} parent=1 // pred_region
      %s55 = ssub.s32 4096, 4096
      %56 = vsyncadd [#allocation9], %s55
      %s57 = sshll.u32 [#allocation8], 4
      %s58 = int_to_ptr.vmem [resolvable:$true] %s57
      %63 = dma.hbm_to_vmem [thread:$0]  %s4, 4096, %s58, [#allocation9], 256, 256, 16
    $region21: #{tpu_custom_call.1} parent=1 // pred_fallthru
      _
    // Predicated region
    $region22: #{tpu_custom_call.1} parent=1 // pred_check
      _
    $region23: #{tpu_custom_call.1} parent=1 // pred_check_branch
      %65 = sbr.rel (0) target = $region25
    $region24: #{tpu_custom_call.1} parent=1 // pred_region
      _
    $region25: #{tpu_custom_call.1} parent=1 // pred_fallthru
      _
    // Predicated region
    $region26: #{tpu_custom_call.1} parent=1 // pred_check
      _
    $region27: #{tpu_custom_call.1} parent=1 // pred_check_branch
      %67 = sbr.rel (0) target = $region29
    $region28: #{tpu_custom_call.1} parent=1 // pred_region
      %68 = dma.done [#allocation3], 128
    $region29: #{tpu_custom_call.1} parent=1 // pred_fallthru
      _
    // Predicated region
    $region30: #{tpu_custom_call.1} parent=1 // pred_check
      _
    $region31: #{tpu_custom_call.1} parent=1 // pred_check_branch
      %70 = sbr.rel (0) target = $region33
    $region32: #{tpu_custom_call.1} parent=1 // pred_region
      %71 = dma.done [#allocation6], 128
    $region33: #{tpu_custom_call.1} parent=1 // pred_fallthru
      _
    // Predicated region
    $region34: #{tpu_custom_call.1} parent=1 // pred_check
      _
    $region35: #{tpu_custom_call.1} parent=1 // pred_check_branch
      %73 = sbr.rel (0) target = $region37
    $region36: #{tpu_custom_call.1} parent=1 // pred_region
      %74 = dma.done [#allocation6], 12288
    $region37: #{tpu_custom_call.1} parent=1 // pred_fallthru
      _
    // Predicated region
    $region38: #{tpu_custom_call.1} parent=1 // pred_check
      _
    $region39: #{tpu_custom_call.1} parent=1 // pred_check_branch
      %76 = sbr.rel (0) target = $region41
    $region40: #{tpu_custom_call.1} parent=1 // pred_region
      %77 = dma.done [#allocation9], 4096
    $region41: #{tpu_custom_call.1} parent=1 // pred_fallthru
      _
    %v79 = vld [vmem:[%s0] sm:$0xff]
    %v80 = vld [vmem:[%s0 + $0x8] sm:$0xff]
    %v81 = vld [vmem:[%s0 + $0x10] sm:$0xff]
    %v82 = vld [vmem:[#allocation2] sm:$0xff]
    %v83 = vld [vmem:[#allocation5] sm:$0xff]
    %v84 = vpack.c.bf16 %v79, %v79
    %v85 = vpack.c.bf16 %v80, %v80
    %v86 = vpack.c.bf16 %v81, %v81
    %v87 = vld [vmem:[#allocation7] sm:$0xff]
    %v88 = vld [vmem:[#allocation7 + $0x8] sm:$0xff]
    %v89 = vld [vmem:[#allocation7 + $0x10] sm:$0xff]
    %v90 = vld [vmem:[#allocation7 + $0x18] sm:$0xff]
    %v91 = vld [vmem:[#allocation7 + $0x20] sm:$0xff]
    %v92 = vld [vmem:[#allocation7 + $0x28] sm:$0xff]
    %v93 = vld [vmem:[#allocation7 + $0x30] sm:$0xff]
    %v94 = vld [vmem:[#allocation7 + $0x38] sm:$0xff]
    %v95 = vld [vmem:[#allocation7 + $0x40] sm:$0xff]
    %v96 = vld [vmem:[#allocation7 + $0x48] sm:$0xff]
    %v97 = vld [vmem:[#allocation7 + $0x50] sm:$0xff]
    %v98 = vld [vmem:[#allocation7 + $0x58] sm:$0xff]
    %v99 = vld [vmem:[#allocation7 + $0x60] sm:$0xff]
    %v100 = vld [vmem:[#allocation7 + $0x68] sm:$0xff]
    %v101 = vld [vmem:[#allocation7 + $0x70] sm:$0xff]
    %v102 = vld [vmem:[#allocation7 + $0x78] sm:$0xff]
    %v103 = vld [vmem:[#allocation7 + $0x80] sm:$0xff]
    %v104 = vld [vmem:[#allocation7 + $0x88] sm:$0xff]
    %v105 = vld [vmem:[#allocation7 + $0x90] sm:$0xff]
    %v106 = vld [vmem:[#allocation7 + $0x98] sm:$0xff]
    %v107 = vld [vmem:[#allocation7 + $0xa0] sm:$0xff]
    %v108 = vld [vmem:[#allocation7 + $0xa8] sm:$0xff]
    %v109 = vld [vmem:[#allocation7 + $0xb0] sm:$0xff]
    %v110 = vld [vmem:[#allocation7 + $0xb8] sm:$0xff]
    %v111 = vld [vmem:[#allocation7 + $0xc0] sm:$0xff]
    %v112 = vld [vmem:[#allocation7 + $0xc8] sm:$0xff]
    %v113 = vld [vmem:[#allocation7 + $0xd0] sm:$0xff]
    %v114 = vld [vmem:[#allocation7 + $0xd8] sm:$0xff]
    %v115 = vld [vmem:[#allocation7 + $0xe0] sm:$0xff]
    %v116 = vld [vmem:[#allocation7 + $0xe8] sm:$0xff]
    %v117 = vld [vmem:[#allocation7 + $0xf0] sm:$0xff]
    %v118 = vld [vmem:[#allocation7 + $0xf8] sm:$0xff]
    %v119 = vld [vmem:[#allocation7 + $0x100] sm:$0xff]
    %v120 = vld [vmem:[#allocation7 + $0x108] sm:$0xff]
    %v121 = vld [vmem:[#allocation7 + $0x110] sm:$0xff]
    %v122 = vld [vmem:[#allocation7 + $0x118] sm:$0xff]
    %v123 = vld [vmem:[#allocation7 + $0x120] sm:$0xff]
    %v124 = vld [vmem:[#allocation7 + $0x128] sm:$0xff]
    %v125 = vld [vmem:[#allocation7 + $0x130] sm:$0xff]
    %v126 = vld [vmem:[#allocation7 + $0x138] sm:$0xff]
    %v127 = vld [vmem:[#allocation7 + $0x140] sm:$0xff]
    %v128 = vld [vmem:[#allocation7 + $0x148] sm:$0xff]
    %v129 = vld [vmem:[#allocation7 + $0x150] sm:$0xff]
    %v130 = vld [vmem:[#allocation7 + $0x158] sm:$0xff]
    %v131 = vld [vmem:[#allocation7 + $0x160] sm:$0xff]
    %v132 = vld [vmem:[#allocation7 + $0x168] sm:$0xff]
    %v133 = vld [vmem:[#allocation7 + $0x170] sm:$0xff]
    %v134 = vld [vmem:[#allocation7 + $0x178] sm:$0xff]
    %v135 = vld [vmem:[#allocation7 + $0x180] sm:$0xff]
    %v136 = vld [vmem:[#allocation7 + $0x188] sm:$0xff]
    %v137 = vld [vmem:[#allocation7 + $0x190] sm:$0xff]
    %v138 = vld [vmem:[#allocation7 + $0x198] sm:$0xff]
    %v139 = vld [vmem:[#allocation7 + $0x1a0] sm:$0xff]
    %v140 = vld [vmem:[#allocation7 + $0x1a8] sm:$0xff]
    %v141 = vld [vmem:[#allocation7 + $0x1b0] sm:$0xff]
    %v142 = vld [vmem:[#allocation7 + $0x1b8] sm:$0xff]
    %v143 = vld [vmem:[#allocation7 + $0x1c0] sm:$0xff]
    %v144 = vld [vmem:[#allocation7 + $0x1c8] sm:$0xff]
    %v145 = vld [vmem:[#allocation7 + $0x1d0] sm:$0xff]
    %v146 = vld [vmem:[#allocation7 + $0x1d8] sm:$0xff]
    %v147 = vld [vmem:[#allocation7 + $0x1e0] sm:$0xff]
    %v148 = vld [vmem:[#allocation7 + $0x1e8] sm:$0xff]
    %v149 = vld [vmem:[#allocation7 + $0x1f0] sm:$0xff]
    %v150 = vld [vmem:[#allocation7 + $0x1f8] sm:$0xff]
    %v151 = vld [vmem:[#allocation7 + $0x200] sm:$0xff]
    %v152 = vld [vmem:[#allocation7 + $0x208] sm:$0xff]
    %v153 = vld [vmem:[#allocation7 + $0x210] sm:$0xff]
    %v154 = vld [vmem:[#allocation7 + $0x218] sm:$0xff]
    %v155 = vld [vmem:[#allocation7 + $0x220] sm:$0xff]
    %v156 = vld [vmem:[#allocation7 + $0x228] sm:$0xff]
    %v157 = vld [vmem:[#allocation7 + $0x230] sm:$0xff]
    %v158 = vld [vmem:[#allocation7 + $0x238] sm:$0xff]
    %v159 = vld [vmem:[#allocation7 + $0x240] sm:$0xff]
    %v160 = vld [vmem:[#allocation7 + $0x248] sm:$0xff]
    %v161 = vld [vmem:[#allocation7 + $0x250] sm:$0xff]
    %v162 = vld [vmem:[#allocation7 + $0x258] sm:$0xff]
    %v163 = vld [vmem:[#allocation7 + $0x260] sm:$0xff]
    %v164 = vld [vmem:[#allocation7 + $0x268] sm:$0xff]
    %v165 = vld [vmem:[#allocation7 + $0x270] sm:$0xff]
    %v166 = vld [vmem:[#allocation7 + $0x278] sm:$0xff]
    %v167 = vld [vmem:[#allocation7 + $0x280] sm:$0xff]
    %v168 = vld [vmem:[#allocation7 + $0x288] sm:$0xff]
    %v169 = vld [vmem:[#allocation7 + $0x290] sm:$0xff]
    %v170 = vld [vmem:[#allocation7 + $0x298] sm:$0xff]
    %v171 = vld [vmem:[#allocation7 + $0x2a0] sm:$0xff]
    %v172 = vld [vmem:[#allocation7 + $0x2a8] sm:$0xff]
    %v173 = vld [vmem:[#allocation7 + $0x2b0] sm:$0xff]
    %v174 = vld [vmem:[#allocation7 + $0x2b8] sm:$0xff]
    %v175 = vld [vmem:[#allocation7 + $0x2c0] sm:$0xff]
    %v176 = vld [vmem:[#allocation7 + $0x2c8] sm:$0xff]
    %v177 = vld [vmem:[#allocation7 + $0x2d0] sm:$0xff]
    %v178 = vld [vmem:[#allocation7 + $0x2d8] sm:$0xff]
    %v179 = vld [vmem:[#allocation7 + $0x2e0] sm:$0xff]
    %v180 = vld [vmem:[#allocation7 + $0x2e8] sm:$0xff]
    %v181 = vld [vmem:[#allocation7 + $0x2f0] sm:$0xff]
    %v182 = vld [vmem:[#allocation7 + $0x2f8] sm:$0xff]
    %v183 = vpack.c.bf16 %v82, %v82
    %v184 = vld [vmem:[#allocation8] sm:$0xff]
    %v185 = vld [vmem:[#allocation8 + $0x8] sm:$0xff]
    %v186 = vld [vmem:[#allocation8 + $0x10] sm:$0xff]
    %v187 = vld [vmem:[#allocation8 + $0x18] sm:$0xff]
    %v188 = vld [vmem:[#allocation8 + $0x20] sm:$0xff]
    %v189 = vld [vmem:[#allocation8 + $0x28] sm:$0xff]
    %v190 = vld [vmem:[#allocation8 + $0x30] sm:$0xff]
    %v191 = vld [vmem:[#allocation8 + $0x38] sm:$0xff]
    %v192 = vld [vmem:[#allocation8 + $0x40] sm:$0xff]
    %v193 = vld [vmem:[#allocation8 + $0x48] sm:$0xff]
    %v194 = vld [vmem:[#allocation8 + $0x50] sm:$0xff]
    %v195 = vld [vmem:[#allocation8 + $0x58] sm:$0xff]
    %v196 = vld [vmem:[#allocation8 + $0x60] sm:$0xff]
    %v197 = vld [vmem:[#allocation8 + $0x68] sm:$0xff]
    %v198 = vld [vmem:[#allocation8 + $0x70] sm:$0xff]
    %v199 = vld [vmem:[#allocation8 + $0x78] sm:$0xff]
    %v200 = vld [vmem:[#allocation8 + $0x80] sm:$0xff]
    %v201 = vld [vmem:[#allocation8 + $0x88] sm:$0xff]
    %v202 = vld [vmem:[#allocation8 + $0x90] sm:$0xff]
    %v203 = vld [vmem:[#allocation8 + $0x98] sm:$0xff]
    %v204 = vld [vmem:[#allocation8 + $0xa0] sm:$0xff]
    %v205 = vld [vmem:[#allocation8 + $0xa8] sm:$0xff]
    %v206 = vld [vmem:[#allocation8 + $0xb0] sm:$0xff]
    %v207 = vld [vmem:[#allocation8 + $0xb8] sm:$0xff]
    %v208 = vld [vmem:[#allocation8 + $0xc0] sm:$0xff]
    %v209 = vld [vmem:[#allocation8 + $0xc8] sm:$0xff]
    %v210 = vld [vmem:[#allocation8 + $0xd0] sm:$0xff]
    %v211 = vld [vmem:[#allocation8 + $0xd8] sm:$0xff]
    %v212 = vld [vmem:[#allocation8 + $0xe0] sm:$0xff]
    %v213 = vld [vmem:[#allocation8 + $0xe8] sm:$0xff]
    %v214 = vld [vmem:[#allocation8 + $0xf0] sm:$0xff]
    %v215 = vld [vmem:[#allocation8 + $0xf8] sm:$0xff]
    %v248 = vunpack.c.l.b16 %v184
    %v249 = vunpack.c.h.b16 %v184
    %v250 = vunpack.c.l.b16 %v185
    %v251 = vunpack.c.h.b16 %v185
    %v252 = vunpack.c.l.b16 %v186
    %v253 = vunpack.c.h.b16 %v186
    %v254 = vunpack.c.l.b16 %v187
    %v255 = vunpack.c.h.b16 %v187
    %v256 = vunpack.c.l.b16 %v188
    %v257 = vunpack.c.h.b16 %v188
    %v258 = vunpack.c.l.b16 %v189
    %v259 = vunpack.c.h.b16 %v189
    %v260 = vunpack.c.l.b16 %v190
    %v261 = vunpack.c.h.b16 %v190
    %v262 = vunpack.c.l.b16 %v191
    %v263 = vunpack.c.h.b16 %v191
    %v264 = vunpack.c.l.b16 %v192
    %v265 = vunpack.c.h.b16 %v192
    %v266 = vunpack.c.l.b16 %v193
    %v267 = vunpack.c.h.b16 %v193
    %v268 = vunpack.c.l.b16 %v194
    %v269 = vunpack.c.h.b16 %v194
    %v270 = vunpack.c.l.b16 %v195
    %v271 = vunpack.c.h.b16 %v195
    %v272 = vunpack.c.l.b16 %v196
    %v273 = vunpack.c.h.b16 %v196
    %v274 = vunpack.c.l.b16 %v197
    %v275 = vunpack.c.h.b16 %v197
    %v276 = vunpack.c.l.b16 %v198
    %v277 = vunpack.c.h.b16 %v198
    %v278 = vunpack.c.l.b16 %v199
    %v279 = vunpack.c.h.b16 %v199
    %v280 = vunpack.c.l.b16 %v200
    %v281 = vunpack.c.h.b16 %v200
    %v282 = vunpack.c.l.b16 %v201
    %v283 = vunpack.c.h.b16 %v201
    %v284 = vunpack.c.l.b16 %v202
    %v285 = vunpack.c.h.b16 %v202
    %v286 = vunpack.c.l.b16 %v203
    %v287 = vunpack.c.h.b16 %v203
    %v288 = vunpack.c.l.b16 %v204
    %v289 = vunpack.c.h.b16 %v204
    %v290 = vunpack.c.l.b16 %v205
    %v291 = vunpack.c.h.b16 %v205
    %v292 = vunpack.c.l.b16 %v206
    %v293 = vunpack.c.h.b16 %v206
    %v294 = vunpack.c.l.b16 %v207
    %v295 = vunpack.c.h.b16 %v207
    %v296 = vunpack.c.l.b16 %v208
    %v297 = vunpack.c.h.b16 %v208
    %v298 = vunpack.c.l.b16 %v209
    %v299 = vunpack.c.h.b16 %v209
    %v300 = vunpack.c.l.b16 %v210
    %v301 = vunpack.c.h.b16 %v210
    %v302 = vunpack.c.l.b16 %v211
    %v303 = vunpack.c.h.b16 %v211
    %v304 = vunpack.c.l.b16 %v212
    %v305 = vunpack.c.h.b16 %v212
    %v306 = vunpack.c.l.b16 %v213
    %v307 = vunpack.c.h.b16 %v213
    %v308 = vunpack.c.l.b16 %v214
    %v309 = vunpack.c.h.b16 %v214
    %v310 = vunpack.c.l.b16 %v215
    %v311 = vunpack.c.h.b16 %v215
    %v312 = vpack.c.b16 %v252, %v248
    %v313 = vpack.c.b16 %v253, %v249
    %v314 = vpack.c.b16 %v254, %v250
    %v315 = vpack.c.b16 %v255, %v251
    %v316 = vpack.c.b16 %v260, %v256
    %v317 = vpack.c.b16 %v261, %v257
    %v318 = vpack.c.b16 %v262, %v258
    %v319 = vpack.c.b16 %v263, %v259
    %v320 = vpack.c.b16 %v268, %v264
    %v321 = vpack.c.b16 %v269, %v265
    %v322 = vpack.c.b16 %v270, %v266
    %v323 = vpack.c.b16 %v271, %v267
    %v324 = vpack.c.b16 %v276, %v272
    %v325 = vpack.c.b16 %v277, %v273
    %v326 = vpack.c.b16 %v278, %v274
    %v327 = vpack.c.b16 %v279, %v275
    %v328 = vpack.c.b16 %v284, %v280
    %v329 = vpack.c.b16 %v285, %v281
    %v330 = vpack.c.b16 %v286, %v282
    %v331 = vpack.c.b16 %v287, %v283
    %v332 = vpack.c.b16 %v292, %v288
    %v333 = vpack.c.b16 %v293, %v289
    %v334 = vpack.c.b16 %v294, %v290
    %v335 = vpack.c.b16 %v295, %v291
    %v336 = vpack.c.b16 %v300, %v296
    %v337 = vpack.c.b16 %v301, %v297
    %v338 = vpack.c.b16 %v302, %v298
    %v339 = vpack.c.b16 %v303, %v299
    %v340 = vpack.c.b16 %v308, %v304
    %v341 = vpack.c.b16 %v309, %v305
    %v342 = vpack.c.b16 %v310, %v306
    %v343 = vpack.c.b16 %v311, %v307
    %376 = vmatprep.subr.bf16.mxu0 %v341
    %377 = vmatpush1.bf16.msra.mxu0 %v340
    %378 = vmatprep.subr.bf16.mxu0 %v337
    %379 = vmatpush1.bf16.msra.mxu0 %v336
    %380 = vmatprep.subr.bf16.mxu0 %v333
    %381 = vmatpush1.bf16.msra.mxu0 %v332
    %382 = vmatprep.subr.bf16.mxu0 %v329
    %383 = vmatpush1.bf16.msra.mxu0 %v328
    %384 = vmatprep.subr.bf16.mxu0 %v325
    %385 = vmatpush1.bf16.msra.mxu0 %v324
    %386 = vmatprep.subr.bf16.mxu0 %v321
    %387 = vmatpush1.bf16.msra.mxu0 %v320
    %388 = vmatprep.subr.bf16.mxu0 %v317
    %389 = vmatpush1.bf16.msra.mxu0 %v316
    %390 = vmatprep.subr.bf16.mxu0 %v313
    %391 = vmatpush1.bf16.msra.mxu0 %v312
    %392 = vmatprep.subr.bf16.mxu0 0
    %393 = vmatpush2.bf16.msra.mxu0 0
    %394 = vmatprep.subr.bf16.mxu0 0
    %395 = vmatpush2.bf16.msra.mxu0 0
    %396 = vmatprep.subr.bf16.mxu0 0
    %397 = vmatpush2.bf16.msra.mxu0 0
    %398 = vmatprep.subr.bf16.mxu0 0
    %399 = vmatpush2.bf16.msra.mxu0 0
    %400 = vmatprep.subr.bf16.mxu0 0
    %401 = vmatpush2.bf16.msra.mxu0 0
    %402 = vmatprep.subr.bf16.mxu0 0
    %403 = vmatpush2.bf16.msra.mxu0 0
    %404 = vmatprep.subr.bf16.mxu0 0
    %405 = vmatpush2.bf16.msra.mxu0 0
    %406 = vmatprep.subr.bf16.mxu0 0
    %407 = vmatpush2.bf16.msra.mxu0 0
    %408 = vmatprep.mubr.bf16.mxu0 0
    %409 = vmatmul.mubr.bf16.gmra.mxu0 %v183
    %v410 = vpop.f32.mrf.mxu0
    %v411 = vadd.f32 0.0, %v410
    %v412 = vpop.f32.mrf.mxu0
    %v413 = vadd.f32 0.0, %v412
    %v414 = vpop.f32.mrf.mxu0
    %v415 = vpop.f32.mrf.mxu0
    %416 = vdwg.mxu0
    %417 = vmatprep.subr.bf16.mxu0 %v343
    %418 = vmatpush1.bf16.msra.mxu0 %v342
    %419 = vmatprep.subr.bf16.mxu0 %v339
    %420 = vmatpush1.bf16.msra.mxu0 %v338
    %421 = vmatprep.subr.bf16.mxu0 %v335
    %422 = vmatpush1.bf16.msra.mxu0 %v334
    %423 = vmatprep.subr.bf16.mxu0 %v331
    %424 = vmatpush1.bf16.msra.mxu0 %v330
    %425 = vmatprep.subr.bf16.mxu0 %v327
    %426 = vmatpush1.bf16.msra.mxu0 %v326
    %427 = vmatprep.subr.bf16.mxu0 %v323
    %428 = vmatpush1.bf16.msra.mxu0 %v322
    %429 = vmatprep.subr.bf16.mxu0 %v319
    %430 = vmatpush1.bf16.msra.mxu0 %v318
    %431 = vmatprep.subr.bf16.mxu0 %v315
    %432 = vmatpush1.bf16.msra.mxu0 %v314
    %433 = vmatprep.subr.bf16.mxu0 0
    %434 = vmatpush2.bf16.msra.mxu0 0
    %435 = vmatprep.subr.bf16.mxu0 0
    %436 = vmatpush2.bf16.msra.mxu0 0
    %437 = vmatprep.subr.bf16.mxu0 0
    %438 = vmatpush2.bf16.msra.mxu0 0
    %439 = vmatprep.subr.bf16.mxu0 0
    %440 = vmatpush2.bf16.msra.mxu0 0
    %441 = vmatprep.subr.bf16.mxu0 0
    %442 = vmatpush2.bf16.msra.mxu0 0
    %443 = vmatprep.subr.bf16.mxu0 0
    %444 = vmatpush2.bf16.msra.mxu0 0
    %445 = vmatprep.subr.bf16.mxu0 0
    %446 = vmatpush2.bf16.msra.mxu0 0
    %447 = vmatprep.subr.bf16.mxu0 0
    %448 = vmatpush2.bf16.msra.mxu0 0
    %449 = vmatprep.mubr.bf16.mxu0 0
    %450 = vmatmul.mubr.bf16.gmra.mxu0 %v183
    %v451 = vpop.f32.mrf.mxu0
    %v452 = vadd.f32 0.0, %v451
    %v453 = vpop.f32.mrf.mxu0
    %v454 = vadd.f32 0.0, %v453
    %v455 = vpop.f32.mrf.mxu0
    %v456 = vpop.f32.mrf.mxu0
    %457 = vdwg.mxu0
    %v554 = vunpack.c.l.b16 %v87
    %v555 = vunpack.c.h.b16 %v87
    %v556 = vunpack.c.l.b16 %v88
    %v557 = vunpack.c.h.b16 %v88
    %v558 = vunpack.c.l.b16 %v89
    %v559 = vunpack.c.h.b16 %v89
    %v560 = vunpack.c.l.b16 %v90
    %v561 = vunpack.c.h.b16 %v90
    %v562 = vunpack.c.l.b16 %v91
    %v563 = vunpack.c.h.b16 %v91
    %v564 = vunpack.c.l.b16 %v92
    %v565 = vunpack.c.h.b16 %v92
    %v566 = vunpack.c.l.b16 %v93
    %v567 = vunpack.c.h.b16 %v93
    %v568 = vunpack.c.l.b16 %v94
    %v569 = vunpack.c.h.b16 %v94
    %v570 = vunpack.c.l.b16 %v95
    %v571 = vunpack.c.h.b16 %v95
    %v572 = vunpack.c.l.b16 %v96
    %v573 = vunpack.c.h.b16 %v96
    %v574 = vunpack.c.l.b16 %v97
    %v575 = vunpack.c.h.b16 %v97
    %v576 = vunpack.c.l.b16 %v98
    %v577 = vunpack.c.h.b16 %v98
    %v578 = vunpack.c.l.b16 %v99
    %v579 = vunpack.c.h.b16 %v99
    %v580 = vunpack.c.l.b16 %v100
    %v581 = vunpack.c.h.b16 %v100
    %v582 = vunpack.c.l.b16 %v101
    %v583 = vunpack.c.h.b16 %v101
    %v584 = vunpack.c.l.b16 %v102
    %v585 = vunpack.c.h.b16 %v102
    %v586 = vunpack.c.l.b16 %v103
    %v587 = vunpack.c.h.b16 %v103
    %v588 = vunpack.c.l.b16 %v104
    %v589 = vunpack.c.h.b16 %v104
    %v590 = vunpack.c.l.b16 %v105
    %v591 = vunpack.c.h.b16 %v105
    %v592 = vunpack.c.l.b16 %v106
    %v593 = vunpack.c.h.b16 %v106
    %v594 = vunpack.c.l.b16 %v107
    %v595 = vunpack.c.h.b16 %v107
    %v596 = vunpack.c.l.b16 %v108
    %v597 = vunpack.c.h.b16 %v108
    %v598 = vunpack.c.l.b16 %v109
    %v599 = vunpack.c.h.b16 %v109
    %v600 = vunpack.c.l.b16 %v110
    %v601 = vunpack.c.h.b16 %v110
    %v602 = vunpack.c.l.b16 %v111
    %v603 = vunpack.c.h.b16 %v111
    %v604 = vunpack.c.l.b16 %v112
    %v605 = vunpack.c.h.b16 %v112
    %v606 = vunpack.c.l.b16 %v113
    %v607 = vunpack.c.h.b16 %v113
    %v608 = vunpack.c.l.b16 %v114
    %v609 = vunpack.c.h.b16 %v114
    %v610 = vunpack.c.l.b16 %v115
    %v611 = vunpack.c.h.b16 %v115
    %v612 = vunpack.c.l.b16 %v116
    %v613 = vunpack.c.h.b16 %v116
    %v614 = vunpack.c.l.b16 %v117
    %v615 = vunpack.c.h.b16 %v117
    %v616 = vunpack.c.l.b16 %v118
    %v617 = vunpack.c.h.b16 %v118
    %v618 = vunpack.c.l.b16 %v119
    %v619 = vunpack.c.h.b16 %v119
    %v620 = vunpack.c.l.b16 %v120
    %v621 = vunpack.c.h.b16 %v120
    %v622 = vunpack.c.l.b16 %v121
    %v623 = vunpack.c.h.b16 %v121
    %v624 = vunpack.c.l.b16 %v122
    %v625 = vunpack.c.h.b16 %v122
    %v626 = vunpack.c.l.b16 %v123
    %v627 = vunpack.c.h.b16 %v123
    %v628 = vunpack.c.l.b16 %v124
    %v629 = vunpack.c.h.b16 %v124
    %v630 = vunpack.c.l.b16 %v125
    %v631 = vunpack.c.h.b16 %v125
    %v632 = vunpack.c.l.b16 %v126
    %v633 = vunpack.c.h.b16 %v126
    %v634 = vunpack.c.l.b16 %v127
    %v635 = vunpack.c.h.b16 %v127
    %v636 = vunpack.c.l.b16 %v128
    %v637 = vunpack.c.h.b16 %v128
    %v638 = vunpack.c.l.b16 %v129
    %v639 = vunpack.c.h.b16 %v129
    %v640 = vunpack.c.l.b16 %v130
    %v641 = vunpack.c.h.b16 %v130
    %v642 = vunpack.c.l.b16 %v131
    %v643 = vunpack.c.h.b16 %v131
    %v644 = vunpack.c.l.b16 %v132
    %v645 = vunpack.c.h.b16 %v132
    %v646 = vunpack.c.l.b16 %v133
    %v647 = vunpack.c.h.b16 %v133
    %v648 = vunpack.c.l.b16 %v134
    %v649 = vunpack.c.h.b16 %v134
    %v650 = vunpack.c.l.b16 %v135
    %v651 = vunpack.c.h.b16 %v135
    %v652 = vunpack.c.l.b16 %v136
    %v653 = vunpack.c.h.b16 %v136
    %v654 = vunpack.c.l.b16 %v137
    %v655 = vunpack.c.h.b16 %v137
    %v656 = vunpack.c.l.b16 %v138
    %v657 = vunpack.c.h.b16 %v138
    %v658 = vunpack.c.l.b16 %v139
    %v659 = vunpack.c.h.b16 %v139
    %v660 = vunpack.c.l.b16 %v140
    %v661 = vunpack.c.h.b16 %v140
    %v662 = vunpack.c.l.b16 %v141
    %v663 = vunpack.c.h.b16 %v141
    %v664 = vunpack.c.l.b16 %v142
    %v665 = vunpack.c.h.b16 %v142
    %v666 = vunpack.c.l.b16 %v143
    %v667 = vunpack.c.h.b16 %v143
    %v668 = vunpack.c.l.b16 %v144
    %v669 = vunpack.c.h.b16 %v144
    %v670 = vunpack.c.l.b16 %v145
    %v671 = vunpack.c.h.b16 %v145
    %v672 = vunpack.c.l.b16 %v146
    %v673 = vunpack.c.h.b16 %v146
    %v674 = vunpack.c.l.b16 %v147
    %v675 = vunpack.c.h.b16 %v147
    %v676 = vunpack.c.l.b16 %v148
    %v677 = vunpack.c.h.b16 %v148
    %v678 = vunpack.c.l.b16 %v149
    %v679 = vunpack.c.h.b16 %v149
    %v680 = vunpack.c.l.b16 %v150
    %v681 = vunpack.c.h.b16 %v150
    %v682 = vunpack.c.l.b16 %v151
    %v683 = vunpack.c.h.b16 %v151
    %v684 = vunpack.c.l.b16 %v152
    %v685 = vunpack.c.h.b16 %v152
    %v686 = vunpack.c.l.b16 %v153
    %v687 = vunpack.c.h.b16 %v153
    %v688 = vunpack.c.l.b16 %v154
    %v689 = vunpack.c.h.b16 %v154
    %v690 = vunpack.c.l.b16 %v155
    %v691 = vunpack.c.h.b16 %v155
    %v692 = vunpack.c.l.b16 %v156
    %v693 = vunpack.c.h.b16 %v156
    %v694 = vunpack.c.l.b16 %v157
    %v695 = vunpack.c.h.b16 %v157
    %v696 = vunpack.c.l.b16 %v158
    %v697 = vunpack.c.h.b16 %v158
    %v698 = vunpack.c.l.b16 %v159
    %v699 = vunpack.c.h.b16 %v159
    %v700 = vunpack.c.l.b16 %v160
    %v701 = vunpack.c.h.b16 %v160
    %v702 = vunpack.c.l.b16 %v161
    %v703 = vunpack.c.h.b16 %v161
    %v704 = vunpack.c.l.b16 %v162
    %v705 = vunpack.c.h.b16 %v162
    %v706 = vunpack.c.l.b16 %v163
    %v707 = vunpack.c.h.b16 %v163
    %v708 = vunpack.c.l.b16 %v164
    %v709 = vunpack.c.h.b16 %v164
    %v710 = vunpack.c.l.b16 %v165
    %v711 = vunpack.c.h.b16 %v165
    %v712 = vunpack.c.l.b16 %v166
    %v713 = vunpack.c.h.b16 %v166
    %v714 = vunpack.c.l.b16 %v167
    %v715 = vunpack.c.h.b16 %v167
    %v716 = vunpack.c.l.b16 %v168
    %v717 = vunpack.c.h.b16 %v168
    %v718 = vunpack.c.l.b16 %v169
    %v719 = vunpack.c.h.b16 %v169
    %v720 = vunpack.c.l.b16 %v170
    %v721 = vunpack.c.h.b16 %v170
    %v722 = vunpack.c.l.b16 %v171
    %v723 = vunpack.c.h.b16 %v171
    %v724 = vunpack.c.l.b16 %v172
    %v725 = vunpack.c.h.b16 %v172
    %v726 = vunpack.c.l.b16 %v173
    %v727 = vunpack.c.h.b16 %v173
    %v728 = vunpack.c.l.b16 %v174
    %v729 = vunpack.c.h.b16 %v174
    %v730 = vunpack.c.l.b16 %v175
    %v731 = vunpack.c.h.b16 %v175
    %v732 = vunpack.c.l.b16 %v176
    %v733 = vunpack.c.h.b16 %v176
    %v734 = vunpack.c.l.b16 %v177
    %v735 = vunpack.c.h.b16 %v177
    %v736 = vunpack.c.l.b16 %v178
    %v737 = vunpack.c.h.b16 %v178
    %v738 = vunpack.c.l.b16 %v179
    %v739 = vunpack.c.h.b16 %v179
    %v740 = vunpack.c.l.b16 %v180
    %v741 = vunpack.c.h.b16 %v180
    %v742 = vunpack.c.l.b16 %v181
    %v743 = vunpack.c.h.b16 %v181
    %v744 = vunpack.c.l.b16 %v182
    %v745 = vunpack.c.h.b16 %v182
    %v746 = vpack.c.b16 %v558, %v554
    %v747 = vpack.c.b16 %v559, %v555
    %v748 = vpack.c.b16 %v560, %v556
    %v749 = vpack.c.b16 %v561, %v557
    %v750 = vpack.c.b16 %v566, %v562
    %v751 = vpack.c.b16 %v567, %v563
    %v752 = vpack.c.b16 %v568, %v564
    %v753 = vpack.c.b16 %v569, %v565
    %v754 = vpack.c.b16 %v574, %v570
    %v755 = vpack.c.b16 %v575, %v571
    %v756 = vpack.c.b16 %v576, %v572
    %v757 = vpack.c.b16 %v577, %v573
    %v758 = vpack.c.b16 %v582, %v578
    %v759 = vpack.c.b16 %v583, %v579
    %v760 = vpack.c.b16 %v584, %v580
    %v761 = vpack.c.b16 %v585, %v581
    %v762 = vpack.c.b16 %v590, %v586
    %v763 = vpack.c.b16 %v591, %v587
    %v764 = vpack.c.b16 %v592, %v588
    %v765 = vpack.c.b16 %v593, %v589
    %v766 = vpack.c.b16 %v598, %v594
    %v767 = vpack.c.b16 %v599, %v595
    %v768 = vpack.c.b16 %v600, %v596
    %v769 = vpack.c.b16 %v601, %v597
    %v770 = vpack.c.b16 %v606, %v602
    %v771 = vpack.c.b16 %v607, %v603
    %v772 = vpack.c.b16 %v608, %v604
    %v773 = vpack.c.b16 %v609, %v605
    %v774 = vpack.c.b16 %v614, %v610
    %v775 = vpack.c.b16 %v615, %v611
    %v776 = vpack.c.b16 %v616, %v612
    %v777 = vpack.c.b16 %v617, %v613
    %v778 = vpack.c.b16 %v622, %v618
    %v779 = vpack.c.b16 %v623, %v619
    %v780 = vpack.c.b16 %v624, %v620
    %v781 = vpack.c.b16 %v625, %v621
    %v782 = vpack.c.b16 %v630, %v626
    %v783 = vpack.c.b16 %v631, %v627
    %v784 = vpack.c.b16 %v632, %v628
    %v785 = vpack.c.b16 %v633, %v629
    %v786 = vpack.c.b16 %v638, %v634
    %v787 = vpack.c.b16 %v639, %v635
    %v788 = vpack.c.b16 %v640, %v636
    %v789 = vpack.c.b16 %v641, %v637
    %v790 = vpack.c.b16 %v646, %v642
    %v791 = vpack.c.b16 %v647, %v643
    %v792 = vpack.c.b16 %v648, %v644
    %v793 = vpack.c.b16 %v649, %v645
    %v794 = vpack.c.b16 %v654, %v650
    %v795 = vpack.c.b16 %v655, %v651
    %v796 = vpack.c.b16 %v656, %v652
    %v797 = vpack.c.b16 %v657, %v653
    %v798 = vpack.c.b16 %v662, %v658
    %v799 = vpack.c.b16 %v663, %v659
    %v800 = vpack.c.b16 %v664, %v660
    %v801 = vpack.c.b16 %v665, %v661
    %v802 = vpack.c.b16 %v670, %v666
    %v803 = vpack.c.b16 %v671, %v667
    %v804 = vpack.c.b16 %v672, %v668
    %v805 = vpack.c.b16 %v673, %v669
    %v806 = vpack.c.b16 %v678, %v674
    %v807 = vpack.c.b16 %v679, %v675
    %v808 = vpack.c.b16 %v680, %v676
    %v809 = vpack.c.b16 %v681, %v677
    %v810 = vpack.c.b16 %v686, %v682
    %v811 = vpack.c.b16 %v687, %v683
    %v812 = vpack.c.b16 %v688, %v684
    %v813 = vpack.c.b16 %v689, %v685
    %v814 = vpack.c.b16 %v694, %v690
    %v815 = vpack.c.b16 %v695, %v691
    %v816 = vpack.c.b16 %v696, %v692
    %v817 = vpack.c.b16 %v697, %v693
    %v818 = vpack.c.b16 %v702, %v698
    %v819 = vpack.c.b16 %v703, %v699
    %v820 = vpack.c.b16 %v704, %v700
    %v821 = vpack.c.b16 %v705, %v701
    %v822 = vpack.c.b16 %v710, %v706
    %v823 = vpack.c.b16 %v711, %v707
    %v824 = vpack.c.b16 %v712, %v708
    %v825 = vpack.c.b16 %v713, %v709
    %v826 = vpack.c.b16 %v718, %v714
    %v827 = vpack.c.b16 %v719, %v715
    %v828 = vpack.c.b16 %v720, %v716
    %v829 = vpack.c.b16 %v721, %v717
    %v830 = vpack.c.b16 %v726, %v722
    %v831 = vpack.c.b16 %v727, %v723
    %v832 = vpack.c.b16 %v728, %v724
    %v833 = vpack.c.b16 %v729, %v725
    %v834 = vpack.c.b16 %v734, %v730
    %v835 = vpack.c.b16 %v735, %v731
    %v836 = vpack.c.b16 %v736, %v732
    %v837 = vpack.c.b16 %v737, %v733
    %v838 = vpack.c.b16 %v742, %v738
    %v839 = vpack.c.b16 %v743, %v739
    %v840 = vpack.c.b16 %v744, %v740
    %v841 = vpack.c.b16 %v745, %v741
    %938 = vmatprep.subr.bf16.mxu0 %v775
    %939 = vmatpush1.bf16.msra.mxu0 %v774
    %940 = vmatprep.subr.bf16.mxu0 %v771
    %941 = vmatpush1.bf16.msra.mxu0 %v770
    %942 = vmatprep.subr.bf16.mxu0 %v767
    %943 = vmatpush1.bf16.msra.mxu0 %v766
    %944 = vmatprep.subr.bf16.mxu0 %v763
    %945 = vmatpush1.bf16.msra.mxu0 %v762
    %946 = vmatprep.subr.bf16.mxu0 %v759
    %947 = vmatpush1.bf16.msra.mxu0 %v758
    %948 = vmatprep.subr.bf16.mxu0 %v755
    %949 = vmatpush1.bf16.msra.mxu0 %v754
    %950 = vmatprep.subr.bf16.mxu0 %v751
    %951 = vmatpush1.bf16.msra.mxu0 %v750
    %952 = vmatprep.subr.bf16.mxu0 %v747
    %953 = vmatpush1.bf16.msra.mxu0 %v746
    %954 = vmatprep.subr.bf16.mxu0 %v807
    %955 = vmatpush2.bf16.msra.mxu0 %v806
    %956 = vmatprep.subr.bf16.mxu0 %v803
    %957 = vmatpush2.bf16.msra.mxu0 %v802
    %958 = vmatprep.subr.bf16.mxu0 %v799
    %959 = vmatpush2.bf16.msra.mxu0 %v798
    %960 = vmatprep.subr.bf16.mxu0 %v795
    %961 = vmatpush2.bf16.msra.mxu0 %v794
    %962 = vmatprep.subr.bf16.mxu0 %v791
    %963 = vmatpush2.bf16.msra.mxu0 %v790
    %964 = vmatprep.subr.bf16.mxu0 %v787
    %965 = vmatpush2.bf16.msra.mxu0 %v786
    %966 = vmatprep.subr.bf16.mxu0 %v783
    %967 = vmatpush2.bf16.msra.mxu0 %v782
    %968 = vmatprep.subr.bf16.mxu0 %v779
    %969 = vmatpush2.bf16.msra.mxu0 %v778
    %970 = vmatprep.mubr.bf16.mxu0 %v85
    %971 = vmatmul.mubr.bf16.gmra.mxu0 %v84
    %v972 = vpop.f32.mrf.mxu0
    %v973 = vadd.f32 %v411, %v972
    %v974 = vpop.f32.mrf.mxu0
    %v975 = vadd.f32 %v413, %v974
    %v976 = vpop.f32.mrf.mxu0
    %v977 = vpop.f32.mrf.mxu0
    %978 = vdwg.mxu0
    %979 = vmatprep.subr.bf16.mxu0 %v839
    %980 = vmatpush1.bf16.msra.mxu0 %v838
    %981 = vmatprep.subr.bf16.mxu0 %v835
    %982 = vmatpush1.bf16.msra.mxu0 %v834
    %983 = vmatprep.subr.bf16.mxu0 %v831
    %984 = vmatpush1.bf16.msra.mxu0 %v830
    %985 = vmatprep.subr.bf16.mxu0 %v827
    %986 = vmatpush1.bf16.msra.mxu0 %v826
    %987 = vmatprep.subr.bf16.mxu0 %v823
    %988 = vmatpush1.bf16.msra.mxu0 %v822
    %989 = vmatprep.subr.bf16.mxu0 %v819
    %990 = vmatpush1.bf16.msra.mxu0 %v818
    %991 = vmatprep.subr.bf16.mxu0 %v815
    %992 = vmatpush1.bf16.msra.mxu0 %v814
    %993 = vmatprep.subr.bf16.mxu0 %v811
    %994 = vmatpush1.bf16.msra.mxu0 %v810
    %995 = vmatprep.subr.bf16.mxu0 0
    %996 = vmatpush2.bf16.msra.mxu0 0
    %997 = vmatprep.subr.bf16.mxu0 0
    %998 = vmatpush2.bf16.msra.mxu0 0
    %999 = vmatprep.subr.bf16.mxu0 0
    %1000 = vmatpush2.bf16.msra.mxu0 0
    %1001 = vmatprep.subr.bf16.mxu0 0
    %1002 = vmatpush2.bf16.msra.mxu0 0
    %1003 = vmatprep.subr.bf16.mxu0 0
    %1004 = vmatpush2.bf16.msra.mxu0 0
    %1005 = vmatprep.subr.bf16.mxu0 0
    %1006 = vmatpush2.bf16.msra.mxu0 0
    %1007 = vmatprep.subr.bf16.mxu0 0
    %1008 = vmatpush2.bf16.msra.mxu0 0
    %1009 = vmatprep.subr.bf16.mxu0 0
    %1010 = vmatpush2.bf16.msra.mxu0 0
    %1011 = vmatprep.mubr.bf16.mxu0 0
    %1012 = vmatmul.mubr.bf16.gmra.mxu0 %v86
    %v1013 = vpop.f32.mrf.mxu0
    %v1014 = vadd.f32 %v973, %v1013
    %v1015 = vpop.f32.mrf.mxu0
    %v1016 = vadd.f32 %v975, %v1015
    %v1017 = vpop.f32.mrf.mxu0
    %v1018 = vpop.f32.mrf.mxu0
    %1019 = vdwg.mxu0
    %1020 = vmatprep.subr.bf16.mxu0 %v777
    %1021 = vmatpush1.bf16.msra.mxu0 %v776
    %1022 = vmatprep.subr.bf16.mxu0 %v773
    %1023 = vmatpush1.bf16.msra.mxu0 %v772
    %1024 = vmatprep.subr.bf16.mxu0 %v769
    %1025 = vmatpush1.bf16.msra.mxu0 %v768
    %1026 = vmatprep.subr.bf16.mxu0 %v765
    %1027 = vmatpush1.bf16.msra.mxu0 %v764
    %1028 = vmatprep.subr.bf16.mxu0 %v761
    %1029 = vmatpush1.bf16.msra.mxu0 %v760
    %1030 = vmatprep.subr.bf16.mxu0 %v757
    %1031 = vmatpush1.bf16.msra.mxu0 %v756
    %1032 = vmatprep.subr.bf16.mxu0 %v753
    %1033 = vmatpush1.bf16.msra.mxu0 %v752
    %1034 = vmatprep.subr.bf16.mxu0 %v749
    %1035 = vmatpush1.bf16.msra.mxu0 %v748
    %1036 = vmatprep.subr.bf16.mxu0 %v809
    %1037 = vmatpush2.bf16.msra.mxu0 %v808
    %1038 = vmatprep.subr.bf16.mxu0 %v805
    %1039 = vmatpush2.bf16.msra.mxu0 %v804
    %1040 = vmatprep.subr.bf16.mxu0 %v801
    %1041 = vmatpush2.bf16.msra.mxu0 %v800
    %1042 = vmatprep.subr.bf16.mxu0 %v797
    %1043 = vmatpush2.bf16.msra.mxu0 %v796
    %1044 = vmatprep.subr.bf16.mxu0 %v793
    %1045 = vmatpush2.bf16.msra.mxu0 %v792
    %1046 = vmatprep.subr.bf16.mxu0 %v789
    %1047 = vmatpush2.bf16.msra.mxu0 %v788
    %1048 = vmatprep.subr.bf16.mxu0 %v785
    %1049 = vmatpush2.bf16.msra.mxu0 %v784
    %1050 = vmatprep.subr.bf16.mxu0 %v781
    %1051 = vmatpush2.bf16.msra.mxu0 %v780
    %1052 = vmatprep.mubr.bf16.mxu0 %v85
    %1053 = vmatmul.mubr.bf16.gmra.mxu0 %v84
    %v1054 = vpop.f32.mrf.mxu0
    %v1055 = vadd.f32 %v452, %v1054
    %v1056 = vpop.f32.mrf.mxu0
    %v1057 = vadd.f32 %v454, %v1056
    %v1058 = vpop.f32.mrf.mxu0
    %v1059 = vpop.f32.mrf.mxu0
    %1060 = vdwg.mxu0
    %1061 = vmatprep.subr.bf16.mxu0 %v841
    %1062 = vmatpush1.bf16.msra.mxu0 %v840
    %1063 = vmatprep.subr.bf16.mxu0 %v837
    %1064 = vmatpush1.bf16.msra.mxu0 %v836
    %1065 = vmatprep.subr.bf16.mxu0 %v833
    %1066 = vmatpush1.bf16.msra.mxu0 %v832
    %1067 = vmatprep.subr.bf16.mxu0 %v829
    %1068 = vmatpush1.bf16.msra.mxu0 %v828
    %1069 = vmatprep.subr.bf16.mxu0 %v825
    %1070 = vmatpush1.bf16.msra.mxu0 %v824
    %1071 = vmatprep.subr.bf16.mxu0 %v821
    %1072 = vmatpush1.bf16.msra.mxu0 %v820
    %1073 = vmatprep.subr.bf16.mxu0 %v817
    %1074 = vmatpush1.bf16.msra.mxu0 %v816
    %1075 = vmatprep.subr.bf16.mxu0 %v813
    %1076 = vmatpush1.bf16.msra.mxu0 %v812
    %1077 = vmatprep.subr.bf16.mxu0 0
    %1078 = vmatpush2.bf16.msra.mxu0 0
    %1079 = vmatprep.subr.bf16.mxu0 0
    %1080 = vmatpush2.bf16.msra.mxu0 0
    %1081 = vmatprep.subr.bf16.mxu0 0
    %1082 = vmatpush2.bf16.msra.mxu0 0
    %1083 = vmatprep.subr.bf16.mxu0 0
    %1084 = vmatpush2.bf16.msra.mxu0 0
    %1085 = vmatprep.subr.bf16.mxu0 0
    %1086 = vmatpush2.bf16.msra.mxu0 0
    %1087 = vmatprep.subr.bf16.mxu0 0
    %1088 = vmatpush2.bf16.msra.mxu0 0
    %1089 = vmatprep.subr.bf16.mxu0 0
    %1090 = vmatpush2.bf16.msra.mxu0 0
    %1091 = vmatprep.subr.bf16.mxu0 0
    %1092 = vmatpush2.bf16.msra.mxu0 0
    %1093 = vmatprep.mubr.bf16.mxu0 0
    %1094 = vmatmul.mubr.bf16.gmra.mxu0 %v86
    %v1095 = vpop.f32.mrf.mxu0
    %v1096 = vadd.f32 %v1055, %v1095
    %v1097 = vpop.f32.mrf.mxu0
    %v1098 = vadd.f32 %v1057, %v1097
    %v1099 = vpop.f32.mrf.mxu0
    %v1100 = vpop.f32.mrf.mxu0
    %1101 = vdwg.mxu0
    %v1102 = vld [vmem:[%s5] sm:$0xf]
    %v1104 = vlaneseq
    %v1105 = vshrl.u32 %v1104, 7
    %v1106 = vsub.s32 0, %v1105
    %v1107 = vrot.slane %v1102, %v1106
    %v1108 = vlaneseq
    %v1109 = vshrl.u32 %v1108, 7
    %v1110 = vsub.s32 1, %v1109
    %v1111 = vrot.slane %v1102, %v1110
    %v1112 = vlaneseq
    %v1113 = vshrl.u32 %v1112, 7
    %v1114 = vsub.s32 2, %v1113
    %v1115 = vrot.slane %v1102, %v1114
    %v1116 = vlaneseq
    %v1117 = vshrl.u32 %v1116, 7
    %v1118 = vsub.s32 3, %v1117
    %v1119 = vrot.slane %v1102, %v1118
    %v1124 = vadd.f32 %v1014, %v1107
    %v1125 = vadd.f32 %v1016, %v1111
    %v1126 = vadd.f32 %v1096, %v1115
    %v1127 = vadd.f32 %v1098, %v1119
    %v1128 = vxor.u32 %v1124, 2147483648
    %v1129 = vxor.u32 %v1125, 2147483648
    %v1130 = vxor.u32 %v1126, 2147483648
    %v1131 = vmul.f32 %v1128, 1.442695
    %v1132 = vpow.pop %v1131
    %v1133 = vmul.f32 %v1129, 1.442695
    %v1134 = vpow.pop %v1133
    %v1135 = vmul.f32 %v1130, 1.442695
    %v1136 = vpow.pop %v1135
    %v1137 = vadd.f32 %v1132, 1.0
    %v1138 = vadd.f32 %v1134, 1.0
    %v1139 = vadd.f32 %v1136, 1.0
    %v1140 = vrcp.pop %v1137
    %v1141 = vmul.f32 1.0, %v1140
    %v1142 = vrcp.pop %v1138
    %v1143 = vmul.f32 1.0, %v1142
    %v1144 = vrcp.pop %v1139
    %v1145 = vmul.f32 1.0, %v1144
    %v1146 = vtanh.pop %v1127
    %v1147 = vmul.f32 %v1141, %v83
    %v1148 = vmul.f32 %v1143, %v1146
    %v1149 = vadd.f32 %v1147, %v1148
    %v1150 = vtanh.pop %v1149
    %v1151 = vmul.f32 %v1145, %v1150
    %1152 = vst [vmem:[#allocation10] sm:$0xff] %v1151
    %1153 = vst [vmem:[#allocation11] sm:$0xff] %v1149
    // Predicated region
    $region42: #{tpu_custom_call.1} parent=1 // pred_check
      _
    $region43: #{tpu_custom_call.1} parent=1 // pred_check_branch
      %1155 = sbr.rel (0) target = $region45
    $region44: #{tpu_custom_call.1} parent=1 // pred_region
      %s1157 = ssub.s32 128, 128
      %1158 = vsyncadd [#allocation4], %s1157
      %s1160 = sshll.u32 [#allocation10], 4
      %s1161 = int_to_ptr.vmem [resolvable:$true] %s1160
      %1163 = dma.vmem_to_hbm [thread:$0]  %s1161, 128, %s6, [#allocation4]
    $region45: #{tpu_custom_call.1} parent=1 // pred_fallthru
      _
    // Predicated region
    $region46: #{tpu_custom_call.1} parent=1 // pred_check
      _
    $region47: #{tpu_custom_call.1} parent=1 // pred_check_branch
      %1165 = sbr.rel (0) target = $region49
    $region48: #{tpu_custom_call.1} parent=1 // pred_region
      %s1167 = ssub.s32 128, 128
      %1168 = vsyncadd [#allocation12], %s1167
      %s1170 = sshll.u32 [#allocation11], 4
      %s1171 = int_to_ptr.vmem [resolvable:$true] %s1170
      %1173 = dma.vmem_to_hbm [thread:$0]  %s1171, 128, %s7, [#allocation12]
    $region49: #{tpu_custom_call.1} parent=1 // pred_fallthru
      _
    // Predicated region
    $region50: #{tpu_custom_call.1} parent=1 // pred_check
      _
    $region51: #{tpu_custom_call.1} parent=1 // pred_check_branch
      %1175 = sbr.rel (0) target = $region53
    $region52: #{tpu_custom_call.1} parent=1 // pred_region
      %1176 = dma.done [#allocation4], 128
    $region53: #{tpu_custom_call.1} parent=1 // pred_fallthru
      _
    // Predicated region
    $region54: #{tpu_custom_call.1} parent=1 // pred_check
      _
    $region55: #{tpu_custom_call.1} parent=1 // pred_check_branch
      %1178 = sbr.rel (0) target = $region57
    $region56: #{tpu_custom_call.1} parent=1 // pred_region
      %1179 = dma.done [#allocation12], 128
    $region57: #{tpu_custom_call.1} parent=1 // pred_fallthru
      _
    %1180 = vsyncpa [#allocation3], 1
    %1181 = vsyncpa [#allocation6], 1
    %1182 = vsyncpa [#allocation9], 1
    %1183 = vsyncpa [#allocation4], 1
    %1184 = vsyncpa [#allocation12], 1

</llo_original>
